<compile_context>
chip_gen: v5e
topology: v5e:2x2
jax: 0.10.0
libtpu: 0.0.40
codegen_flags: <defaults>
</compile_context>

<pallas_src>
import functools

import jax
import jax.numpy as jnp
from jax.experimental import pallas as pl
from jax.experimental.pallas import tpu as pltpu


def gru_kernel(x_ref, w_ih_ref, w_hh_ref, b_i_ref, b_hn_ref, len_ref,
               w_fc_ref, b_fc_ref, maxlen_ref, out_ref, gi_ref,
               *, batch, hidden_dim, seq_len, static_unroll):
    """Single-invocation fused GRU + head.

    x_ref     : (T*B, E)   bf16   embedded tokens, time-major, flattened
    w_ih_ref  : (E, 3H)    bf16   fused input-hidden weights, gate order r|z|n
    w_hh_ref  : (H, 3H)    bf16   fused hidden-hidden weights, gate order r|z|n
    b_i_ref   : (1, 3H)    f32    [b_ir+b_hr | b_iz+b_hz | b_in]
    b_hn_ref  : (B, H)     f32    b_hn broadcast over batch
    len_ref   : (B, H)     i32    valid lengths broadcast over H
    w_fc_ref  : (1, H)     bf16   fc1 weight
    b_fc_ref  : (1,)       f32    fc1 bias            (SMEM)
    maxlen_ref: (1,)       i32    max(lengths)        (SMEM, dynamic-trip path)
    out_ref   : (1, B)     f32    sigmoid(fc1(h_final)), lane-dense
    gi_ref    : (T*B, 3H)  f32    VMEM scratch, fused hoisted input projections
    """
    f32 = jnp.float32
    H = hidden_dim

    # ---- One-time pre-pass: fused hoisted input projection (one big MXU matmul). ----
    gi_ref[...] = jnp.dot(x_ref[...], w_ih_ref[...],
                          preferred_element_type=f32) + b_i_ref[...]

    # ---- Hoist loop-invariant loads out of the recurrence. ----
    whh = w_hh_ref[...]        # (H, 3H) bf16, fused r|z|n
    bhn = b_hn_ref[...]        # (B, H)  f32
    lens = len_ref[...]        # (B, H)  i32

    # ---- Serial recurrence: one h @ W_hh matmul + gate math on the critical chain. ----
    def step(t, h):
        off = pl.multiple_of(t * batch, batch)
        gi = gi_ref[pl.ds(off, batch), :]                      # (B, 3H) f32

        hb = h.astype(jnp.bfloat16)
        gh = jnp.dot(hb, whh, preferred_element_type=f32)      # (B, 3H) f32

        # Single EUP push for the fused r|z slab, then cheap lane slices.
        rz = jax.nn.sigmoid(gi[:, :2 * H] + gh[:, :2 * H])     # (B, 2H)
        r = rz[:, :H]
        z = rz[:, H:]
        n = jnp.tanh(gi[:, 2 * H:] + r * (gh[:, 2 * H:] + bhn))
        h_new = (1.0 - z) * n + z * h

        # pack_padded_sequence semantics: freeze hidden once t >= length[b].
        return jnp.where(lens > t, h_new, h)

    h0 = jnp.zeros((batch, H), f32)
    if static_unroll:
        # T small & compile-time known: static fully-unrolled loop (mask keeps it correct).
        h_final = jax.lax.fori_loop(0, seq_len, step, h0, unroll=True)
    else:
        # Long sequences: dynamic trip count capped at max(lengths).
        h_final = jax.lax.fori_loop(0, maxlen_ref[0], step, h0)

    # ---- fc1 + sigmoid head, bf16 operands / f32 accumulation, lane-dense (1, B). ----
    logits = jax.lax.dot_general(
        w_fc_ref[...], h_final.astype(jnp.bfloat16),
        dimension_numbers=(((1,), (1,)), ((), ())),
        preferred_element_type=f32)                            # (1, B)
    out_ref[...] = jax.nn.sigmoid(logits + b_fc_ref[0])


def rnn_forward(tokens, lengths, params):
    """tokens: (T, B) int32, lengths: (B,) int32. Returns (B,) f32 probabilities."""
    T, B = tokens.shape
    E = params["embedding"].shape[1]
    H = params["w_hh"].shape[1]
    assert B % 8 == 0, "pad batch to a multiple of 8 (sublane alignment)"

    wih, whh = params["w_ih"], params["w_hh"]                  # (3H, E), (3H, H)
    bih, bhh = params["b_ih"], params["b_hh"]

    # Glue: embedding gather, fused weight transposes, bias folding, bf16 casts.
    x_flat = params["embedding"][tokens].astype(jnp.bfloat16).reshape(T * B, E)
    w_ih_all = wih.T.astype(jnp.bfloat16)                      # (E, 3H), columns r|z|n
    w_hh_all = whh.T.astype(jnp.bfloat16)                      # (H, 3H), columns r|z|n
    b_i_all = jnp.concatenate(
        [bih[0:H] + bhh[0:H], bih[H:2 * H] + bhh[H:2 * H], bih[2 * H:3 * H]]
    ).reshape(1, 3 * H).astype(jnp.float32)                    # (1, 3H)
    b_hn = jnp.broadcast_to(bhh[2 * H:3 * H].reshape(1, H), (B, H)).astype(jnp.float32)
    len_b = jnp.broadcast_to(lengths.astype(jnp.int32)[:, None], (B, H))
    maxlen = jnp.max(lengths).astype(jnp.int32).reshape(1)
    w_fc = params["w_fc"].astype(jnp.bfloat16)                 # (1, H)
    b_fc = params["b_fc"].astype(jnp.float32)                  # (1,)

    kernel = functools.partial(gru_kernel, batch=B, hidden_dim=H, seq_len=T,
                               static_unroll=(T <= 16))
    vmem = pltpu.MemorySpace.VMEM
    smem = pltpu.MemorySpace.SMEM

    out = pl.pallas_call(
        kernel,
        out_shape=jax.ShapeDtypeStruct((1, B), jnp.float32),
        in_specs=[
            pl.BlockSpec(memory_space=vmem),   # x          (T*B, E)
            pl.BlockSpec(memory_space=vmem),   # w_ih fused (E, 3H)
            pl.BlockSpec(memory_space=vmem),   # w_hh fused (H, 3H)
            pl.BlockSpec(memory_space=vmem),   # fused bias (1, 3H)
            pl.BlockSpec(memory_space=vmem),   # b_hn bcast (B, H)
            pl.BlockSpec(memory_space=vmem),   # lengths    (B, H)
            pl.BlockSpec(memory_space=vmem),   # w_fc       (1, H)
            pl.BlockSpec(memory_space=smem),   # b_fc       (1,)
            pl.BlockSpec(memory_space=smem),   # maxlen     (1,)
        ],
        out_specs=pl.BlockSpec(memory_space=vmem),
        scratch_shapes=[
            pltpu.VMEM((T * B, 3 * H), jnp.float32),   # fused gi (r|z|n)
        ],
        compiler_params=pltpu.CompilerParams(
            vmem_limit_bytes=32 * 1024 * 1024),
    )(x_flat, w_ih_all, w_hh_all, b_i_all, b_hn, len_b, w_fc, b_fc, maxlen)

    return out[0]


def rnn_reference(tokens, lengths, params):
    """Pure-JAX reference matching the PyTorch forward (same bf16 MXU casts)."""
    H = params["w_hh"].shape[1]
    x_emb = params["embedding"][tokens].astype(jnp.bfloat16)   # (T, B, E)
    wih = params["w_ih"].astype(jnp.bfloat16)
    whh = params["w_hh"].astype(jnp.bfloat16)
    T, B, _ = x_emb.shape
    h0 = jnp.zeros((B, H), jnp.float32)

    def step(h, inp):
        x_t, t = inp
        gi = jnp.dot(x_t, wih.T, preferred_element_type=jnp.float32) + params["b_ih"]
        gh = jnp.dot(h.astype(jnp.bfloat16), whh.T,
                     preferred_element_type=jnp.float32) + params["b_hh"]
        r = jax.nn.sigmoid(gi[:, :H] + gh[:, :H])
        z = jax.nn.sigmoid(gi[:, H:2 * H] + gh[:, H:2 * H])
        n = jnp.tanh(gi[:, 2 * H:] + r * gh[:, 2 * H:])
        h_new = (1.0 - z) * n + z * h
        mask = (lengths > t)[:, None]
        return jnp.where(mask, h_new, h), None

    h_final, _ = jax.lax.scan(step, h0, (x_emb, jnp.arange(T)))
    logits = h_final @ params["w_fc"].T + params["b_fc"]
    return jax.nn.sigmoid(logits)[:, 0]


if __name__ == "__main__":
    T, B = 8, 8          # seq length, batch
    E, H = 32, 32        # embedding dim, hidden dim
    VOCAB = 50

    key = jax.random.PRNGKey(0)
    keys = jax.random.split(key, 8)

    params = {
        "embedding": jax.random.normal(keys[0], (VOCAB, E), jnp.float32) * 0.1,
        "w_ih": jax.random.normal(keys[1], (3 * H, E), jnp.float32) * 0.1,
        "w_hh": jax.random.normal(keys[2], (3 * H, H), jnp.float32) * 0.1,
        "b_ih": jax.random.normal(keys[3], (3 * H,), jnp.float32) * 0.1,
        "b_hh": jax.random.normal(keys[4], (3 * H,), jnp.float32) * 0.1,
        "w_fc": jax.random.normal(keys[5], (1, H), jnp.float32) * 0.1,
        "b_fc": jax.random.normal(keys[6], (1,), jnp.float32) * 0.1,
    }

    tokens = jax.random.randint(keys[7], (T, B), 0, VOCAB, dtype=jnp.int32)
    # Decreasing lengths (pack_padded_sequence default expects sorted lengths).
    lengths = jnp.array([8, 8, 7, 6, 5, 4, 3, 2], dtype=jnp.int32)

    y = rnn_forward(tokens, lengths, params)
    y = jax.block_until_ready(y)

    y_ref = jax.block_until_ready(rnn_reference(tokens, lengths, params))
    assert y.shape == (B,)
    assert jnp.allclose(y, y_ref, atol=2e-3, rtol=2e-3), (y, y_ref)

    print("KERNEL_OK")
</pallas_src>

<mosaic_0001>
module attributes {stable_mosaic.version = 11 : i64} {
  func.func @gru_kernel(%arg0: memref<64x32xbf16, #tpu.memory_space<vmem>>, %arg1: memref<32x96xbf16, #tpu.memory_space<vmem>>, %arg2: memref<32x96xbf16, #tpu.memory_space<vmem>>, %arg3: memref<1x96xf32, #tpu.memory_space<vmem>>, %arg4: memref<8x32xf32, #tpu.memory_space<vmem>>, %arg5: memref<8x32xi32, #tpu.memory_space<vmem>>, %arg6: memref<1x32xbf16, #tpu.memory_space<vmem>>, %arg7: memref<1xf32, #tpu.memory_space<smem>>, %arg8: memref<1xi32, #tpu.memory_space<smem>>, %arg9: memref<1x8xf32, #tpu.memory_space<vmem>>, %arg10: memref<64x96xf32, #tpu.memory_space<vmem>>) attributes {dimension_semantics = [], scalar_prefetch = 0 : i64, scratch_operands = 1 : i64, tpu.core_type = #tpu.core_type<tc>} {
    %c0 = arith.constant 0 : index
    %c0_0 = arith.constant 0 : index
    %0 = vector.load %arg0[%c0, %c0_0] : memref<64x32xbf16, #tpu.memory_space<vmem>>, vector<64x32xbf16>
    %c0_1 = arith.constant 0 : index
    %c0_2 = arith.constant 0 : index
    %1 = vector.load %arg1[%c0_1, %c0_2] : memref<32x96xbf16, #tpu.memory_space<vmem>>, vector<32x96xbf16>
    %cst = arith.constant dense<0.000000e+00> : vector<64x96xf32>
    %2 = tpu.matmul %0, %1, %cst {dimension_numbers = #tpu.dot_dimension_numbers<[1], [0], [0], [1], [0, 0, 1, 1], [], []>} : vector<64x32xbf16>, vector<32x96xbf16>, vector<64x96xf32> -> vector<64x96xf32>
    %c0_3 = arith.constant 0 : index
    %c0_4 = arith.constant 0 : index
    %3 = vector.load %arg3[%c0_3, %c0_4] : memref<1x96xf32, #tpu.memory_space<vmem>>, vector<1x96xf32>
    %4 = vector.broadcast %3 : vector<1x96xf32> to vector<64x96xf32>
    %5 = arith.addf %2, %4 : vector<64x96xf32>
    %c0_5 = arith.constant 0 : index
    %c0_6 = arith.constant 0 : index
    %6 = vector.load %arg10[%c0_5, %c0_6] : memref<64x96xf32, #tpu.memory_space<vmem>>, vector<64x96xf32>
    tpu.vector_store %arg10[%c0_5, %c0_6], %5 {strides = array<i32>} : memref<64x96xf32, #tpu.memory_space<vmem>>, vector<64x96xf32>,
    %c0_7 = arith.constant 0 : index
    %c0_8 = arith.constant 0 : index
    %7 = vector.load %arg2[%c0_7, %c0_8] : memref<32x96xbf16, #tpu.memory_space<vmem>>, vector<32x96xbf16>
    %c0_9 = arith.constant 0 : index
    %c0_10 = arith.constant 0 : index
    %8 = vector.load %arg4[%c0_9, %c0_10] : memref<8x32xf32, #tpu.memory_space<vmem>>, vector<8x32xf32>
    %c0_11 = arith.constant 0 : index
    %c0_12 = arith.constant 0 : index
    %9 = vector.load %arg5[%c0_11, %c0_12] : memref<8x32xi32, #tpu.memory_space<vmem>>, vector<8x32xi32>
    %cst_13 = arith.constant 0.000000e+00 : f32
    %10 = vector.broadcast %cst_13 : f32 to vector<8x32xf32>
    %c0_i32 = arith.constant 0 : i32
    %c8_i32 = arith.constant 8 : i32
    %11 = arith.muli %c0_i32, %c8_i32 : i32
    %12 = tpu.assume_multiple %11, 8 : i32
    %13 = arith.index_cast %12 : i32 to index
    %c0_14 = arith.constant 0 : index
    %14 = vector.load %arg10[%13, %c0_14] : memref<64x96xf32, #tpu.memory_space<vmem>>, vector<8x96xf32>
    %15 = arith.truncf %10 : vector<8x32xf32> to vector<8x32xbf16>
    %cst_15 = arith.constant dense<0.000000e+00> : vector<8x96xf32>
    %16 = tpu.matmul %15, %7, %cst_15 {dimension_numbers = #tpu.dot_dimension_numbers<[1], [0], [0], [1], [0, 0, 1, 1], [], []>} : vector<8x32xbf16>, vector<32x96xbf16>, vector<8x96xf32> -> vector<8x96xf32>
    %17 = vector.extract_strided_slice %14 {offsets = [0, 0], sizes = [8, 64], strides = [1, 1]} : vector<8x96xf32> to vector<8x64xf32>
    %18 = vector.extract_strided_slice %16 {offsets = [0, 0], sizes = [8, 64], strides = [1, 1]} : vector<8x96xf32> to vector<8x64xf32>
    %19 = arith.addf %17, %18 : vector<8x64xf32>
    %20 = arith.negf %19 : vector<8x64xf32>
    %21 = math.exp %20 : vector<8x64xf32>
    %cst_16 = arith.constant 1.000000e+00 : f32
    %22 = vector.broadcast %cst_16 : f32 to vector<8x64xf32>
    %23 = arith.addf %22, %21 : vector<8x64xf32>
    %24 = arith.divf %22, %23 : vector<8x64xf32>
    %25 = vector.extract_strided_slice %24 {offsets = [0, 0], sizes = [8, 32], strides = [1, 1]} : vector<8x64xf32> to vector<8x32xf32>
    %26 = vector.extract_strided_slice %24 {offsets = [0, 32], sizes = [8, 32], strides = [1, 1]} : vector<8x64xf32> to vector<8x32xf32>
    %27 = vector.extract_strided_slice %14 {offsets = [0, 64], sizes = [8, 32], strides = [1, 1]} : vector<8x96xf32> to vector<8x32xf32>
    %28 = vector.extract_strided_slice %16 {offsets = [0, 64], sizes = [8, 32], strides = [1, 1]} : vector<8x96xf32> to vector<8x32xf32>
    %29 = arith.addf %28, %8 : vector<8x32xf32>
    %30 = arith.mulf %25, %29 : vector<8x32xf32>
    %31 = arith.addf %27, %30 : vector<8x32xf32>
    %32 = math.tanh %31 : vector<8x32xf32>
    %cst_17 = arith.constant 1.000000e+00 : f32
    %33 = vector.broadcast %cst_17 : f32 to vector<8x32xf32>
    %34 = arith.subf %33, %26 : vector<8x32xf32>
    %35 = arith.mulf %34, %32 : vector<8x32xf32>
    %36 = arith.mulf %26, %10 : vector<8x32xf32>
    %37 = arith.addf %35, %36 : vector<8x32xf32>
    %38 = vector.broadcast %c0_i32 : i32 to vector<8x32xi32>
    %39 = arith.cmpi sgt, %9, %38 : vector<8x32xi32>
    %40 = arith.select %39, %37, %10 : vector<8x32xi1>, vector<8x32xf32>
    %c1_i32 = arith.constant 1 : i32
    %c8_i32_18 = arith.constant 8 : i32
    %41 = arith.muli %c1_i32, %c8_i32_18 : i32
    %42 = tpu.assume_multiple %41, 8 : i32
    %43 = arith.index_cast %42 : i32 to index
    %c0_19 = arith.constant 0 : index
    %44 = vector.load %arg10[%43, %c0_19] : memref<64x96xf32, #tpu.memory_space<vmem>>, vector<8x96xf32>
    %45 = arith.truncf %40 : vector<8x32xf32> to vector<8x32xbf16>
    %cst_20 = arith.constant dense<0.000000e+00> : vector<8x96xf32>
    %46 = tpu.matmul %45, %7, %cst_20 {dimension_numbers = #tpu.dot_dimension_numbers<[1], [0], [0], [1], [0, 0, 1, 1], [], []>} : vector<8x32xbf16>, vector<32x96xbf16>, vector<8x96xf32> -> vector<8x96xf32>
    %47 = vector.extract_strided_slice %44 {offsets = [0, 0], sizes = [8, 64], strides = [1, 1]} : vector<8x96xf32> to vector<8x64xf32>
    %48 = vector.extract_strided_slice %46 {offsets = [0, 0], sizes = [8, 64], strides = [1, 1]} : vector<8x96xf32> to vector<8x64xf32>
    %49 = arith.addf %47, %48 : vector<8x64xf32>
    %50 = arith.negf %49 : vector<8x64xf32>
    %51 = math.exp %50 : vector<8x64xf32>
    %cst_21 = arith.constant 1.000000e+00 : f32
    %52 = vector.broadcast %cst_21 : f32 to vector<8x64xf32>
    %53 = arith.addf %52, %51 : vector<8x64xf32>
    %54 = arith.divf %52, %53 : vector<8x64xf32>
    %55 = vector.extract_strided_slice %54 {offsets = [0, 0], sizes = [8, 32], strides = [1, 1]} : vector<8x64xf32> to vector<8x32xf32>
    %56 = vector.extract_strided_slice %54 {offsets = [0, 32], sizes = [8, 32], strides = [1, 1]} : vector<8x64xf32> to vector<8x32xf32>
    %57 = vector.extract_strided_slice %44 {offsets = [0, 64], sizes = [8, 32], strides = [1, 1]} : vector<8x96xf32> to vector<8x32xf32>
    %58 = vector.extract_strided_slice %46 {offsets = [0, 64], sizes = [8, 32], strides = [1, 1]} : vector<8x96xf32> to vector<8x32xf32>
    %59 = arith.addf %58, %8 : vector<8x32xf32>
    %60 = arith.mulf %55, %59 : vector<8x32xf32>
    %61 = arith.addf %57, %60 : vector<8x32xf32>
    %62 = math.tanh %61 : vector<8x32xf32>
    %cst_22 = arith.constant 1.000000e+00 : f32
    %63 = vector.broadcast %cst_22 : f32 to vector<8x32xf32>
    %64 = arith.subf %63, %56 : vector<8x32xf32>
    %65 = arith.mulf %64, %62 : vector<8x32xf32>
    %66 = arith.mulf %56, %40 : vector<8x32xf32>
    %67 = arith.addf %65, %66 : vector<8x32xf32>
    %68 = vector.broadcast %c1_i32 : i32 to vector<8x32xi32>
    %69 = arith.cmpi sgt, %9, %68 : vector<8x32xi32>
    %70 = arith.select %69, %67, %40 : vector<8x32xi1>, vector<8x32xf32>
    %c2_i32 = arith.constant 2 : i32
    %c8_i32_23 = arith.constant 8 : i32
    %71 = arith.muli %c2_i32, %c8_i32_23 : i32
    %72 = tpu.assume_multiple %71, 8 : i32
    %73 = arith.index_cast %72 : i32 to index
    %c0_24 = arith.constant 0 : index
    %74 = vector.load %arg10[%73, %c0_24] : memref<64x96xf32, #tpu.memory_space<vmem>>, vector<8x96xf32>
    %75 = arith.truncf %70 : vector<8x32xf32> to vector<8x32xbf16>
    %cst_25 = arith.constant dense<0.000000e+00> : vector<8x96xf32>
    %76 = tpu.matmul %75, %7, %cst_25 {dimension_numbers = #tpu.dot_dimension_numbers<[1], [0], [0], [1], [0, 0, 1, 1], [], []>} : vector<8x32xbf16>, vector<32x96xbf16>, vector<8x96xf32> -> vector<8x96xf32>
    %77 = vector.extract_strided_slice %74 {offsets = [0, 0], sizes = [8, 64], strides = [1, 1]} : vector<8x96xf32> to vector<8x64xf32>
    %78 = vector.extract_strided_slice %76 {offsets = [0, 0], sizes = [8, 64], strides = [1, 1]} : vector<8x96xf32> to vector<8x64xf32>
    %79 = arith.addf %77, %78 : vector<8x64xf32>
    %80 = arith.negf %79 : vector<8x64xf32>
    %81 = math.exp %80 : vector<8x64xf32>
    %cst_26 = arith.constant 1.000000e+00 : f32
    %82 = vector.broadcast %cst_26 : f32 to vector<8x64xf32>
    %83 = arith.addf %82, %81 : vector<8x64xf32>
    %84 = arith.divf %82, %83 : vector<8x64xf32>
    %85 = vector.extract_strided_slice %84 {offsets = [0, 0], sizes = [8, 32], strides = [1, 1]} : vector<8x64xf32> to vector<8x32xf32>
    %86 = vector.extract_strided_slice %84 {offsets = [0, 32], sizes = [8, 32], strides = [1, 1]} : vector<8x64xf32> to vector<8x32xf32>
    %87 = vector.extract_strided_slice %74 {offsets = [0, 64], sizes = [8, 32], strides = [1, 1]} : vector<8x96xf32> to vector<8x32xf32>
    %88 = vector.extract_strided_slice %76 {offsets = [0, 64], sizes = [8, 32], strides = [1, 1]} : vector<8x96xf32> to vector<8x32xf32>
    %89 = arith.addf %88, %8 : vector<8x32xf32>
    %90 = arith.mulf %85, %89 : vector<8x32xf32>
    %91 = arith.addf %87, %90 : vector<8x32xf32>
    %92 = math.tanh %91 : vector<8x32xf32>
    %cst_27 = arith.constant 1.000000e+00 : f32
    %93 = vector.broadcast %cst_27 : f32 to vector<8x32xf32>
    %94 = arith.subf %93, %86 : vector<8x32xf32>
    %95 = arith.mulf %94, %92 : vector<8x32xf32>
    %96 = arith.mulf %86, %70 : vector<8x32xf32>
    %97 = arith.addf %95, %96 : vector<8x32xf32>
    %98 = vector.broadcast %c2_i32 : i32 to vector<8x32xi32>
    %99 = arith.cmpi sgt, %9, %98 : vector<8x32xi32>
    %100 = arith.select %99, %97, %70 : vector<8x32xi1>, vector<8x32xf32>
    %c3_i32 = arith.constant 3 : i32
    %c8_i32_28 = arith.constant 8 : i32
    %101 = arith.muli %c3_i32, %c8_i32_28 : i32
    %102 = tpu.assume_multiple %101, 8 : i32
    %103 = arith.index_cast %102 : i32 to index
    %c0_29 = arith.constant 0 : index
    %104 = vector.load %arg10[%103, %c0_29] : memref<64x96xf32, #tpu.memory_space<vmem>>, vector<8x96xf32>
    %105 = arith.truncf %100 : vector<8x32xf32> to vector<8x32xbf16>
    %cst_30 = arith.constant dense<0.000000e+00> : vector<8x96xf32>
    %106 = tpu.matmul %105, %7, %cst_30 {dimension_numbers = #tpu.dot_dimension_numbers<[1], [0], [0], [1], [0, 0, 1, 1], [], []>} : vector<8x32xbf16>, vector<32x96xbf16>, vector<8x96xf32> -> vector<8x96xf32>
    %107 = vector.extract_strided_slice %104 {offsets = [0, 0], sizes = [8, 64], strides = [1, 1]} : vector<8x96xf32> to vector<8x64xf32>
    %108 = vector.extract_strided_slice %106 {offsets = [0, 0], sizes = [8, 64], strides = [1, 1]} : vector<8x96xf32> to vector<8x64xf32>
    %109 = arith.addf %107, %108 : vector<8x64xf32>
    %110 = arith.negf %109 : vector<8x64xf32>
    %111 = math.exp %110 : vector<8x64xf32>
    %cst_31 = arith.constant 1.000000e+00 : f32
    %112 = vector.broadcast %cst_31 : f32 to vector<8x64xf32>
    %113 = arith.addf %112, %111 : vector<8x64xf32>
    %114 = arith.divf %112, %113 : vector<8x64xf32>
    %115 = vector.extract_strided_slice %114 {offsets = [0, 0], sizes = [8, 32], strides = [1, 1]} : vector<8x64xf32> to vector<8x32xf32>
    %116 = vector.extract_strided_slice %114 {offsets = [0, 32], sizes = [8, 32], strides = [1, 1]} : vector<8x64xf32> to vector<8x32xf32>
    %117 = vector.extract_strided_slice %104 {offsets = [0, 64], sizes = [8, 32], strides = [1, 1]} : vector<8x96xf32> to vector<8x32xf32>
    %118 = vector.extract_strided_slice %106 {offsets = [0, 64], sizes = [8, 32], strides = [1, 1]} : vector<8x96xf32> to vector<8x32xf32>
    %119 = arith.addf %118, %8 : vector<8x32xf32>
    %120 = arith.mulf %115, %119 : vector<8x32xf32>
    %121 = arith.addf %117, %120 : vector<8x32xf32>
    %122 = math.tanh %121 : vector<8x32xf32>
    %cst_32 = arith.constant 1.000000e+00 : f32
    %123 = vector.broadcast %cst_32 : f32 to vector<8x32xf32>
    %124 = arith.subf %123, %116 : vector<8x32xf32>
    %125 = arith.mulf %124, %122 : vector<8x32xf32>
    %126 = arith.mulf %116, %100 : vector<8x32xf32>
    %127 = arith.addf %125, %126 : vector<8x32xf32>
    %128 = vector.broadcast %c3_i32 : i32 to vector<8x32xi32>
    %129 = arith.cmpi sgt, %9, %128 : vector<8x32xi32>
    %130 = arith.select %129, %127, %100 : vector<8x32xi1>, vector<8x32xf32>
    %c4_i32 = arith.constant 4 : i32
    %c8_i32_33 = arith.constant 8 : i32
    %131 = arith.muli %c4_i32, %c8_i32_33 : i32
    %132 = tpu.assume_multiple %131, 8 : i32
    %133 = arith.index_cast %132 : i32 to index
    %c0_34 = arith.constant 0 : index
    %134 = vector.load %arg10[%133, %c0_34] : memref<64x96xf32, #tpu.memory_space<vmem>>, vector<8x96xf32>
    %135 = arith.truncf %130 : vector<8x32xf32> to vector<8x32xbf16>
    %cst_35 = arith.constant dense<0.000000e+00> : vector<8x96xf32>
    %136 = tpu.matmul %135, %7, %cst_35 {dimension_numbers = #tpu.dot_dimension_numbers<[1], [0], [0], [1], [0, 0, 1, 1], [], []>} : vector<8x32xbf16>, vector<32x96xbf16>, vector<8x96xf32> -> vector<8x96xf32>
    %137 = vector.extract_strided_slice %134 {offsets = [0, 0], sizes = [8, 64], strides = [1, 1]} : vector<8x96xf32> to vector<8x64xf32>
    %138 = vector.extract_strided_slice %136 {offsets = [0, 0], sizes = [8, 64], strides = [1, 1]} : vector<8x96xf32> to vector<8x64xf32>
    %139 = arith.addf %137, %138 : vector<8x64xf32>
    %140 = arith.negf %139 : vector<8x64xf32>
    %141 = math.exp %140 : vector<8x64xf32>
    %cst_36 = arith.constant 1.000000e+00 : f32
    %142 = vector.broadcast %cst_36 : f32 to vector<8x64xf32>
    %143 = arith.addf %142, %141 : vector<8x64xf32>
    %144 = arith.divf %142, %143 : vector<8x64xf32>
    %145 = vector.extract_strided_slice %144 {offsets = [0, 0], sizes = [8, 32], strides = [1, 1]} : vector<8x64xf32> to vector<8x32xf32>
    %146 = vector.extract_strided_slice %144 {offsets = [0, 32], sizes = [8, 32], strides = [1, 1]} : vector<8x64xf32> to vector<8x32xf32>
    %147 = vector.extract_strided_slice %134 {offsets = [0, 64], sizes = [8, 32], strides = [1, 1]} : vector<8x96xf32> to vector<8x32xf32>
    %148 = vector.extract_strided_slice %136 {offsets = [0, 64], sizes = [8, 32], strides = [1, 1]} : vector<8x96xf32> to vector<8x32xf32>
    %149 = arith.addf %148, %8 : vector<8x32xf32>
    %150 = arith.mulf %145, %149 : vector<8x32xf32>
    %151 = arith.addf %147, %150 : vector<8x32xf32>
    %152 = math.tanh %151 : vector<8x32xf32>
    %cst_37 = arith.constant 1.000000e+00 : f32
    %153 = vector.broadcast %cst_37 : f32 to vector<8x32xf32>
    %154 = arith.subf %153, %146 : vector<8x32xf32>
    %155 = arith.mulf %154, %152 : vector<8x32xf32>
    %156 = arith.mulf %146, %130 : vector<8x32xf32>
    %157 = arith.addf %155, %156 : vector<8x32xf32>
    %158 = vector.broadcast %c4_i32 : i32 to vector<8x32xi32>
    %159 = arith.cmpi sgt, %9, %158 : vector<8x32xi32>
    %160 = arith.select %159, %157, %130 : vector<8x32xi1>, vector<8x32xf32>
    %c5_i32 = arith.constant 5 : i32
    %c8_i32_38 = arith.constant 8 : i32
    %161 = arith.muli %c5_i32, %c8_i32_38 : i32
    %162 = tpu.assume_multiple %161, 8 : i32
    %163 = arith.index_cast %162 : i32 to index
    %c0_39 = arith.constant 0 : index
    %164 = vector.load %arg10[%163, %c0_39] : memref<64x96xf32, #tpu.memory_space<vmem>>, vector<8x96xf32>
    %165 = arith.truncf %160 : vector<8x32xf32> to vector<8x32xbf16>
    %cst_40 = arith.constant dense<0.000000e+00> : vector<8x96xf32>
    %166 = tpu.matmul %165, %7, %cst_40 {dimension_numbers = #tpu.dot_dimension_numbers<[1], [0], [0], [1], [0, 0, 1, 1], [], []>} : vector<8x32xbf16>, vector<32x96xbf16>, vector<8x96xf32> -> vector<8x96xf32>
    %167 = vector.extract_strided_slice %164 {offsets = [0, 0], sizes = [8, 64], strides = [1, 1]} : vector<8x96xf32> to vector<8x64xf32>
    %168 = vector.extract_strided_slice %166 {offsets = [0, 0], sizes = [8, 64], strides = [1, 1]} : vector<8x96xf32> to vector<8x64xf32>
    %169 = arith.addf %167, %168 : vector<8x64xf32>
    %170 = arith.negf %169 : vector<8x64xf32>
    %171 = math.exp %170 : vector<8x64xf32>
    %cst_41 = arith.constant 1.000000e+00 : f32
    %172 = vector.broadcast %cst_41 : f32 to vector<8x64xf32>
    %173 = arith.addf %172, %171 : vector<8x64xf32>
    %174 = arith.divf %172, %173 : vector<8x64xf32>
    %175 = vector.extract_strided_slice %174 {offsets = [0, 0], sizes = [8, 32], strides = [1, 1]} : vector<8x64xf32> to vector<8x32xf32>
    %176 = vector.extract_strided_slice %174 {offsets = [0, 32], sizes = [8, 32], strides = [1, 1]} : vector<8x64xf32> to vector<8x32xf32>
    %177 = vector.extract_strided_slice %164 {offsets = [0, 64], sizes = [8, 32], strides = [1, 1]} : vector<8x96xf32> to vector<8x32xf32>
    %178 = vector.extract_strided_slice %166 {offsets = [0, 64], sizes = [8, 32], strides = [1, 1]} : vector<8x96xf32> to vector<8x32xf32>
    %179 = arith.addf %178, %8 : vector<8x32xf32>
    %180 = arith.mulf %175, %179 : vector<8x32xf32>
    %181 = arith.addf %177, %180 : vector<8x32xf32>
    %182 = math.tanh %181 : vector<8x32xf32>
    %cst_42 = arith.constant 1.000000e+00 : f32
    %183 = vector.broadcast %cst_42 : f32 to vector<8x32xf32>
    %184 = arith.subf %183, %176 : vector<8x32xf32>
    %185 = arith.mulf %184, %182 : vector<8x32xf32>
    %186 = arith.mulf %176, %160 : vector<8x32xf32>
    %187 = arith.addf %185, %186 : vector<8x32xf32>
    %188 = vector.broadcast %c5_i32 : i32 to vector<8x32xi32>
    %189 = arith.cmpi sgt, %9, %188 : vector<8x32xi32>
    %190 = arith.select %189, %187, %160 : vector<8x32xi1>, vector<8x32xf32>
    %c6_i32 = arith.constant 6 : i32
    %c8_i32_43 = arith.constant 8 : i32
    %191 = arith.muli %c6_i32, %c8_i32_43 : i32
    %192 = tpu.assume_multiple %191, 8 : i32
    %193 = arith.index_cast %192 : i32 to index
    %c0_44 = arith.constant 0 : index
    %194 = vector.load %arg10[%193, %c0_44] : memref<64x96xf32, #tpu.memory_space<vmem>>, vector<8x96xf32>
    %195 = arith.truncf %190 : vector<8x32xf32> to vector<8x32xbf16>
    %cst_45 = arith.constant dense<0.000000e+00> : vector<8x96xf32>
    %196 = tpu.matmul %195, %7, %cst_45 {dimension_numbers = #tpu.dot_dimension_numbers<[1], [0], [0], [1], [0, 0, 1, 1], [], []>} : vector<8x32xbf16>, vector<32x96xbf16>, vector<8x96xf32> -> vector<8x96xf32>
    %197 = vector.extract_strided_slice %194 {offsets = [0, 0], sizes = [8, 64], strides = [1, 1]} : vector<8x96xf32> to vector<8x64xf32>
    %198 = vector.extract_strided_slice %196 {offsets = [0, 0], sizes = [8, 64], strides = [1, 1]} : vector<8x96xf32> to vector<8x64xf32>
    %199 = arith.addf %197, %198 : vector<8x64xf32>
    %200 = arith.negf %199 : vector<8x64xf32>
    %201 = math.exp %200 : vector<8x64xf32>
    %cst_46 = arith.constant 1.000000e+00 : f32
    %202 = vector.broadcast %cst_46 : f32 to vector<8x64xf32>
    %203 = arith.addf %202, %201 : vector<8x64xf32>
    %204 = arith.divf %202, %203 : vector<8x64xf32>
    %205 = vector.extract_strided_slice %204 {offsets = [0, 0], sizes = [8, 32], strides = [1, 1]} : vector<8x64xf32> to vector<8x32xf32>
    %206 = vector.extract_strided_slice %204 {offsets = [0, 32], sizes = [8, 32], strides = [1, 1]} : vector<8x64xf32> to vector<8x32xf32>
    %207 = vector.extract_strided_slice %194 {offsets = [0, 64], sizes = [8, 32], strides = [1, 1]} : vector<8x96xf32> to vector<8x32xf32>
    %208 = vector.extract_strided_slice %196 {offsets = [0, 64], sizes = [8, 32], strides = [1, 1]} : vector<8x96xf32> to vector<8x32xf32>
    %209 = arith.addf %208, %8 : vector<8x32xf32>
    %210 = arith.mulf %205, %209 : vector<8x32xf32>
    %211 = arith.addf %207, %210 : vector<8x32xf32>
    %212 = math.tanh %211 : vector<8x32xf32>
    %cst_47 = arith.constant 1.000000e+00 : f32
    %213 = vector.broadcast %cst_47 : f32 to vector<8x32xf32>
    %214 = arith.subf %213, %206 : vector<8x32xf32>
    %215 = arith.mulf %214, %212 : vector<8x32xf32>
    %216 = arith.mulf %206, %190 : vector<8x32xf32>
    %217 = arith.addf %215, %216 : vector<8x32xf32>
    %218 = vector.broadcast %c6_i32 : i32 to vector<8x32xi32>
    %219 = arith.cmpi sgt, %9, %218 : vector<8x32xi32>
    %220 = arith.select %219, %217, %190 : vector<8x32xi1>, vector<8x32xf32>
    %c7_i32 = arith.constant 7 : i32
    %c8_i32_48 = arith.constant 8 : i32
    %221 = arith.muli %c7_i32, %c8_i32_48 : i32
    %222 = tpu.assume_multiple %221, 8 : i32
    %223 = arith.index_cast %222 : i32 to index
    %c0_49 = arith.constant 0 : index
    %224 = vector.load %arg10[%223, %c0_49] : memref<64x96xf32, #tpu.memory_space<vmem>>, vector<8x96xf32>
    %225 = arith.truncf %220 : vector<8x32xf32> to vector<8x32xbf16>
    %cst_50 = arith.constant dense<0.000000e+00> : vector<8x96xf32>
    %226 = tpu.matmul %225, %7, %cst_50 {dimension_numbers = #tpu.dot_dimension_numbers<[1], [0], [0], [1], [0, 0, 1, 1], [], []>} : vector<8x32xbf16>, vector<32x96xbf16>, vector<8x96xf32> -> vector<8x96xf32>
    %227 = vector.extract_strided_slice %224 {offsets = [0, 0], sizes = [8, 64], strides = [1, 1]} : vector<8x96xf32> to vector<8x64xf32>
    %228 = vector.extract_strided_slice %226 {offsets = [0, 0], sizes = [8, 64], strides = [1, 1]} : vector<8x96xf32> to vector<8x64xf32>
    %229 = arith.addf %227, %228 : vector<8x64xf32>
    %230 = arith.negf %229 : vector<8x64xf32>
    %231 = math.exp %230 : vector<8x64xf32>
    %cst_51 = arith.constant 1.000000e+00 : f32
    %232 = vector.broadcast %cst_51 : f32 to vector<8x64xf32>
    %233 = arith.addf %232, %231 : vector<8x64xf32>
    %234 = arith.divf %232, %233 : vector<8x64xf32>
    %235 = vector.extract_strided_slice %234 {offsets = [0, 0], sizes = [8, 32], strides = [1, 1]} : vector<8x64xf32> to vector<8x32xf32>
    %236 = vector.extract_strided_slice %234 {offsets = [0, 32], sizes = [8, 32], strides = [1, 1]} : vector<8x64xf32> to vector<8x32xf32>
    %237 = vector.extract_strided_slice %224 {offsets = [0, 64], sizes = [8, 32], strides = [1, 1]} : vector<8x96xf32> to vector<8x32xf32>
    %238 = vector.extract_strided_slice %226 {offsets = [0, 64], sizes = [8, 32], strides = [1, 1]} : vector<8x96xf32> to vector<8x32xf32>
    %239 = arith.addf %238, %8 : vector<8x32xf32>
    %240 = arith.mulf %235, %239 : vector<8x32xf32>
    %241 = arith.addf %237, %240 : vector<8x32xf32>
    %242 = math.tanh %241 : vector<8x32xf32>
    %cst_52 = arith.constant 1.000000e+00 : f32
    %243 = vector.broadcast %cst_52 : f32 to vector<8x32xf32>
    %244 = arith.subf %243, %236 : vector<8x32xf32>
    %245 = arith.mulf %244, %242 : vector<8x32xf32>
    %246 = arith.mulf %236, %220 : vector<8x32xf32>
    %247 = arith.addf %245, %246 : vector<8x32xf32>
    %248 = vector.broadcast %c7_i32 : i32 to vector<8x32xi32>
    %249 = arith.cmpi sgt, %9, %248 : vector<8x32xi32>
    %250 = arith.select %249, %247, %220 : vector<8x32xi1>, vector<8x32xf32>
    %c8_i32_53 = arith.constant 8 : i32
    %c0_54 = arith.constant 0 : index
    %c0_55 = arith.constant 0 : index
    %251 = vector.load %arg6[%c0_54, %c0_55] : memref<1x32xbf16, #tpu.memory_space<vmem>>, vector<1x32xbf16>
    %252 = arith.truncf %250 : vector<8x32xf32> to vector<8x32xbf16>
    %cst_56 = arith.constant dense<0.000000e+00> : vector<1x8xf32>
    %253 = tpu.matmul %251, %252, %cst_56 {dimension_numbers = #tpu.dot_dimension_numbers<[1], [1], [0], [0], [0, 0, 1, 0], [], []>} : vector<1x32xbf16>, vector<8x32xbf16>, vector<1x8xf32> -> vector<1x8xf32>
    %c0_57 = arith.constant 0 : index
    %254 = memref.load %arg7[%c0_57] : memref<1xf32, #tpu.memory_space<smem>>
    %255 = vector.broadcast %254 : f32 to vector<1x8xf32>
    %256 = arith.addf %253, %255 : vector<1x8xf32>
    %257 = arith.negf %256 : vector<1x8xf32>
    %258 = math.exp %257 : vector<1x8xf32>
    %cst_58 = arith.constant 1.000000e+00 : f32
    %259 = vector.broadcast %cst_58 : f32 to vector<1x8xf32>
    %260 = arith.addf %259, %258 : vector<1x8xf32>
    %261 = arith.divf %259, %260 : vector<1x8xf32>
    %c0_59 = arith.constant 0 : index
    %c0_60 = arith.constant 0 : index
    %262 = vector.load %arg9[%c0_59, %c0_60] : memref<1x8xf32, #tpu.memory_space<vmem>>, vector<1x8xf32>
    tpu.vector_store %arg9[%c0_59, %c0_60], %261 {strides = array<i32>} : memref<1x8xf32, #tpu.memory_space<vmem>>, vector<1x8xf32>,
    return
  }
}

</mosaic_0001>

<llo_original>
// kernel: tpu_custom_call.1
$region0: #{tpu_custom_call.1}
  #allocation0 [shape = 'u32[]', space=smem, size = 0x4, offset = 0x4, fixed_abs, tag = 'smem constant byte address 0x4 - core index']
  #allocation1 [shape = 'u32[72,128]{1,0:T(1,128)}', space=vmem, size = 0x9000, scoped, tag = 'internal scratch']
  #allocation2 [shape = 'f32[64,96]{1,0:T(8,128)}', space=vmem, size = 0x8000, scoped, tag = 'scratch operand']
  #allocation3 [shape = 'f32[1]{0:T(128)S(6)}', space=smem, size = 0x200, scoped, tag = 'scoped memory for tpu_custom_call.1']
  #allocation4 [shape = 's32[1]{0:T(128)S(6)}', space=smem, size = 0x200, scoped, tag = 'scoped memory for tpu_custom_call.1']
  %s0 = inlined_call_operand.vmem [shape: bf16[64,32], index: 0, kind: input, shape index: {}]
  %s1 = inlined_call_operand.vmem [shape: bf16[32,96], index: 1, kind: input, shape index: {}]
  %s2 = inlined_call_operand.vmem [shape: bf16[32,96], index: 2, kind: input, shape index: {}]
  %s3 = inlined_call_operand.vmem [shape: f32[1,96], index: 3, kind: input, shape index: {}]
  %s4 = inlined_call_operand.vmem [shape: f32[8,32], index: 4, kind: input, shape index: {}]
  %s5 = inlined_call_operand.vmem [shape: s32[8,32], index: 5, kind: input, shape index: {}]
  %s6 = inlined_call_operand.vmem [shape: bf16[1,32], index: 6, kind: input, shape index: {}]
  %s7 = inlined_call_operand.<no memory space> [shape: f32[1], index: 7, kind: input, shape index: {}]
  %s8 = inlined_call_operand.<no memory space> [shape: s32[1], index: 8, kind: input, shape index: {}]
  %s9 = inlined_call_operand.hbm [shape: f32[1,8], index: 9, kind: output, shape index: {}]
  %s10 = sld [smem:[#allocation0]]
  $region46: #{tpu_custom_call.1} parent=0
    _
  %s12 = ssub.s32 1, %s10
  %s13 = scalar_select 0, %s12, %s10
  %14 = sst [smem:[#allocation3]] %s7
  %15 = sst [smem:[#allocation4]] %s8
  $region1: #{tpu_custom_call.1} parent=0
    #allocation5 [shape = 'u8[512]{0}', space=vmem, size = 0x400, scoped, tag = 'output window, operand 0, single buffered']
    #allocation6 [shape = 's32[1]{0}', space=sflag, size = 0x4, scoped, tag = 'scoped memory for tpu_custom_call.1']
    %16 = vsyncpa [#allocation6], 0
    // Predicated region
    $region2: #{tpu_custom_call.1} parent=1 // pred_check
      _
    $region3: #{tpu_custom_call.1} parent=1 // pred_check_branch
      %18 = sbr.rel (0) target = $region5
    $region4: #{tpu_custom_call.1} parent=1 // pred_region
      _
    $region5: #{tpu_custom_call.1} parent=1 // pred_fallthru
      _
    // Predicated region
    $region6: #{tpu_custom_call.1} parent=1 // pred_check
      _
    $region7: #{tpu_custom_call.1} parent=1 // pred_check_branch
      %20 = sbr.rel (0) target = $region9
    $region8: #{tpu_custom_call.1} parent=1 // pred_region
      _
    $region9: #{tpu_custom_call.1} parent=1 // pred_fallthru
      _
    // Predicated region
    $region10: #{tpu_custom_call.1} parent=1 // pred_check
      _
    $region11: #{tpu_custom_call.1} parent=1 // pred_check_branch
      %22 = sbr.rel (0) target = $region13
    $region12: #{tpu_custom_call.1} parent=1 // pred_region
      _
    $region13: #{tpu_custom_call.1} parent=1 // pred_fallthru
      _
    // Predicated region
    $region14: #{tpu_custom_call.1} parent=1 // pred_check
      _
    $region15: #{tpu_custom_call.1} parent=1 // pred_check_branch
      %24 = sbr.rel (0) target = $region17
    $region16: #{tpu_custom_call.1} parent=1 // pred_region
      _
    $region17: #{tpu_custom_call.1} parent=1 // pred_fallthru
      _
    // Predicated region
    $region18: #{tpu_custom_call.1} parent=1 // pred_check
      _
    $region19: #{tpu_custom_call.1} parent=1 // pred_check_branch
      %26 = sbr.rel (0) target = $region21
    $region20: #{tpu_custom_call.1} parent=1 // pred_region
      _
    $region21: #{tpu_custom_call.1} parent=1 // pred_fallthru
      _
    // Predicated region
    $region22: #{tpu_custom_call.1} parent=1 // pred_check
      _
    $region23: #{tpu_custom_call.1} parent=1 // pred_check_branch
      %28 = sbr.rel (0) target = $region25
    $region24: #{tpu_custom_call.1} parent=1 // pred_region
      _
    $region25: #{tpu_custom_call.1} parent=1 // pred_fallthru
      _
    // Predicated region
    $region26: #{tpu_custom_call.1} parent=1 // pred_check
      _
    $region27: #{tpu_custom_call.1} parent=1 // pred_check_branch
      %30 = sbr.rel (0) target = $region29
    $region28: #{tpu_custom_call.1} parent=1 // pred_region
      _
    $region29: #{tpu_custom_call.1} parent=1 // pred_fallthru
      _
    // Predicated region
    $region30: #{tpu_custom_call.1} parent=1 // pred_check
      _
    $region31: #{tpu_custom_call.1} parent=1 // pred_check_branch
      %32 = sbr.rel (0) target = $region33
    $region32: #{tpu_custom_call.1} parent=1 // pred_region
      _
    $region33: #{tpu_custom_call.1} parent=1 // pred_fallthru
      _
    // Predicated region
    $region34: #{tpu_custom_call.1} parent=1 // pred_check
      _
    $region35: #{tpu_custom_call.1} parent=1 // pred_check_branch
      %34 = sbr.rel (0) target = $region37
    $region36: #{tpu_custom_call.1} parent=1 // pred_region
      _
    $region37: #{tpu_custom_call.1} parent=1 // pred_fallthru
      _
    %v36 = vld [vmem:[%s0] sm:$0xf]
    %v37 = vld [vmem:[%s0 + $0x4] sm:$0xf]
    %v38 = vld [vmem:[%s0 + $0x8] sm:$0xf]
    %v39 = vld [vmem:[%s0 + $0xc] sm:$0xf]
    %v40 = vld [vmem:[%s0 + $0x10] sm:$0xf]
    %v41 = vld [vmem:[%s0 + $0x14] sm:$0xf]
    %v42 = vld [vmem:[%s0 + $0x18] sm:$0xf]
    %v43 = vld [vmem:[%s0 + $0x1c] sm:$0xf]
    %v44 = vld [vmem:[%s1] sm:$0xf]
    %v45 = vld [vmem:[%s1 + $0x4] sm:$0xf]
    %v46 = vld [vmem:[%s1 + $0x8] sm:$0xf]
    %v47 = vld [vmem:[%s1 + $0xc] sm:$0xf]
    %v48 = vld [vmem:[%s3] sm:$0x1]
    %v50 = vperm.slane %v48, 0
    %v60 = vunpack.c.l.b16 %v36
    %v61 = vunpack.c.l.b16 %v37
    %v62 = vunpack.c.l.b16 %v38
    %v63 = vunpack.c.l.b16 %v39
    %v64 = vunpack.c.l.b16 %v40
    %v65 = vunpack.c.l.b16 %v41
    %v66 = vunpack.c.l.b16 %v42
    %v67 = vunpack.c.l.b16 %v43
    %v68 = vpack.c.b16 %v61, %v60
    %v69 = vpack.c.b16 %v63, %v62
    %v70 = vpack.c.b16 %v65, %v64
    %v71 = vpack.c.b16 %v67, %v66
    %v76 = vunpack.c.l.b16 %v44
    %v77 = vunpack.c.l.b16 %v45
    %v78 = vunpack.c.l.b16 %v46
    %v79 = vunpack.c.l.b16 %v47
    %v80 = vpack.c.b16 %v77, %v76
    %v81 = vpack.c.b16 %v79, %v78
    %vm84 = vcmask 261120
    %v86 = vsel %vm84, %v68, 0
    %v89 = vsel %vm84, %v69, 0
    %v92 = vsel %vm84, %v70, 0
    %v95 = vsel %vm84, %v71, 0
    %97 = vmatpush.bf16.msra.mxu0 0
    %98 = vmatpush.bf16.msra.mxu0 0
    %99 = vmatpush.bf16.msra.mxu0 0
    %100 = vmatpush.bf16.msra.mxu0 0
    %101 = vmatpush.bf16.msra.mxu0 0
    %102 = vmatpush.bf16.msra.mxu0 0
    %103 = vmatpush.bf16.msra.mxu0 %v81
    %104 = vmatpush.bf16.msra.mxu0 %v80
    %105 = vmatmul.bf16.gmra.mxu0 %v86
    %v106 = vpop.f32.mrf.mxu0
    %v107 = vadd.f32 %v50, %v106
    %v108 = vpop.f32.mrf.mxu0
    %v109 = vadd.f32 %v50, %v108
    %110 = vmatmul.bf16.gmra.mxu0 %v89
    %v111 = vpop.f32.mrf.mxu0
    %v112 = vadd.f32 %v50, %v111
    %v113 = vpop.f32.mrf.mxu0
    %v114 = vadd.f32 %v50, %v113
    %115 = vmatmul.bf16.gmra.mxu0 %v92
    %v116 = vpop.f32.mrf.mxu0
    %v117 = vadd.f32 %v50, %v116
    %v118 = vpop.f32.mrf.mxu0
    %v119 = vadd.f32 %v50, %v118
    %120 = vmatmul.bf16.gmra.mxu0 %v95
    %v121 = vpop.f32.mrf.mxu0
    %v122 = vadd.f32 %v50, %v121
    %v123 = vpop.f32.mrf.mxu0
    %v124 = vadd.f32 %v50, %v123
    %125 = vdwg.mxu0
    %vm126 = vcmask 785408
    %127 = vst.msk [vmem:[#allocation2] sm:$0xff] %vm126, %v107
    %128 = vst.msk [vmem:[#allocation2 + $0x8] sm:$0xff] %vm126, %v109
    %129 = vst.msk [vmem:[#allocation2 + $0x10] sm:$0xff] %vm126, %v112
    %130 = vst.msk [vmem:[#allocation2 + $0x18] sm:$0xff] %vm126, %v114
    %131 = vst.msk [vmem:[#allocation2 + $0x20] sm:$0xff] %vm126, %v117
    %132 = vst.msk [vmem:[#allocation2 + $0x28] sm:$0xff] %vm126, %v119
    %133 = vst.msk [vmem:[#allocation2 + $0x30] sm:$0xff] %vm126, %v122
    %134 = vst.msk [vmem:[#allocation2 + $0x38] sm:$0xff] %vm126, %v124
    %v135 = vld [vmem:[%s2] sm:$0xf]
    %v136 = vld [vmem:[%s2 + $0x4] sm:$0xf]
    %v137 = vld [vmem:[%s2 + $0x8] sm:$0xf]
    %v138 = vld [vmem:[%s2 + $0xc] sm:$0xf]
    %v139 = vld [vmem:[%s4] sm:$0xff]
    %v140 = vld [vmem:[%s5] sm:$0xff]
    %v141 = vld [vmem:[#allocation2] sm:$0xff]
    %v146 = vunpack.c.l.b16 %v135
    %v147 = vunpack.c.l.b16 %v136
    %v148 = vunpack.c.l.b16 %v137
    %v149 = vunpack.c.l.b16 %v138
    %v150 = vpack.c.b16 %v147, %v146
    %v151 = vpack.c.b16 %v149, %v148
    %v155 = vsel %vm84, 0, 0
    %157 = vmatpush.bf16.msra.mxu0 0
    %158 = vmatpush.bf16.msra.mxu0 0
    %159 = vmatpush.bf16.msra.mxu0 0
    %160 = vmatpush.bf16.msra.mxu0 0
    %161 = vmatpush.bf16.msra.mxu0 0
    %162 = vmatpush.bf16.msra.mxu0 0
    %163 = vmatpush.bf16.msra.mxu0 %v151
    %164 = vmatpush.bf16.msra.mxu0 %v150
    %165 = vmatmul.bf16.gmra.mxu0 %v155
    %v166 = vpop.f32.mrf.mxu0
    %v167 = vadd.f32 0.0, %v166
    %v168 = vpop.f32.mrf.mxu0
    %169 = vdwg.mxu0
    %v170 = vadd.f32 %v141, %v167
    %v171 = vxor.u32 %v170, 2147483648
    %v172 = vmul.f32 %v171, 1.442695
    %v173 = vpow.pop %v172
    %v174 = vadd.f32 %v173, 1.0
    %v175 = vrcp.pop %v174
    %v176 = vmul.f32 %v174, %v175
    %v177 = vsub.f32 1.0, %v176
    %v178 = vmul.f32 %v175, %v177
    %v179 = vadd.f32 %v175, %v178
    %vm180 = vweird.f32 %v174
    %vm181 = vweird.f32 %v175
    %vm182 = vmor %vm180, %vm181
    %v183 = vsel %vm182, %v175, %v179
    %v184 = vand.u32 2147483647, %v174
    %vm185 = vcmp.eq.f32.partialorder %v184, 8.507059e+37
    %v186 = vand.u32 %v174, 2147483648
    %v187 = vor.u32 1.1754944e-38, %v186
    %v188 = vsel %vm185, %v187, %v183
    %v189 = vmul.f32 1.0, %v188
    %191 = vrot.lane.b32.xlu0 %v139, 64
    %v192 = vpop.permute.xlu0 %191
    %v194 = vadd.f32 %v167, %v192
    %196 = vrot.lane.b32.xlu0 %v194, 64
    %v197 = vpop.permute.xlu0 %196
    %v199 = vmul.f32 %v189, %v197
    %201 = vrot.lane.b32.xlu0 %v199, 64
    %v202 = vpop.permute.xlu0 %201
    %v204 = vadd.f32 %v141, %v202
    %v205 = vtanh.pop %v204
    %v206 = vsub.f32 1.0, %v189
    %208 = vrot.lane.b32.xlu0 %v205, 96
    %v209 = vpop.permute.xlu0 %208
    %v211 = vmul.f32 %v206, %v209
    %v212 = vmul.f32 %v189, 0.0
    %v213 = vadd.f32 %v211, %v212
    %vm214 = vcmp.gt.s32.totalorder %v140, 0
    %216 = vrot.lane.b32.xlu0 %v213, 96
    %v217 = vpop.permute.xlu0 %216
    %v219 = vsel %vm214, %v217, 0.0
    %s220 = scalar_lea.vmem [#allocation2], 8
    %v221 = vld [vmem:[%s220] sm:$0xff]
    %v222 = vpack.c.bf16 %v219, %v219
    %v224 = vsel %vm84, %v222, 0
    %226 = vmatpush.bf16.msra.mxu0 0
    %227 = vmatpush.bf16.msra.mxu0 0
    %228 = vmatpush.bf16.msra.mxu0 0
    %229 = vmatpush.bf16.msra.mxu0 0
    %230 = vmatpush.bf16.msra.mxu0 0
    %231 = vmatpush.bf16.msra.mxu0 0
    %232 = vmatpush.bf16.msra.mxu0 %v151
    %233 = vmatpush.bf16.msra.mxu0 %v150
    %234 = vmatmul.bf16.gmra.mxu0 %v224
    %v235 = vpop.f32.mrf.mxu0
    %v236 = vadd.f32 0.0, %v235
    %v237 = vpop.f32.mrf.mxu0
    %238 = vdwg.mxu0
    %v239 = vadd.f32 %v221, %v236
    %v240 = vxor.u32 %v239, 2147483648
    %v241 = vmul.f32 %v240, 1.442695
    %v242 = vpow.pop %v241
    %v243 = vadd.f32 %v242, 1.0
    %v244 = vrcp.pop %v243
    %v245 = vmul.f32 %v243, %v244
    %v246 = vsub.f32 1.0, %v245
    %v247 = vmul.f32 %v244, %v246
    %v248 = vadd.f32 %v244, %v247
    %vm249 = vweird.f32 %v243
    %vm250 = vweird.f32 %v244
    %vm251 = vmor %vm249, %vm250
    %v252 = vsel %vm251, %v244, %v248
    %v253 = vand.u32 2147483647, %v243
    %vm254 = vcmp.eq.f32.partialorder %v253, 8.507059e+37
    %v255 = vand.u32 %v243, 2147483648
    %v256 = vor.u32 1.1754944e-38, %v255
    %v257 = vsel %vm254, %v256, %v252
    %v258 = vmul.f32 1.0, %v257
    %v259 = vadd.f32 %v236, %v192
    %261 = vrot.lane.b32.xlu0 %v259, 64
    %v262 = vpop.permute.xlu0 %261
    %v264 = vmul.f32 %v258, %v262
    %266 = vrot.lane.b32.xlu0 %v264, 64
    %v267 = vpop.permute.xlu0 %266
    %v269 = vadd.f32 %v221, %v267
    %v270 = vtanh.pop %v269
    %v271 = vsub.f32 1.0, %v258
    %273 = vrot.lane.b32.xlu0 %v270, 96
    %v274 = vpop.permute.xlu0 %273
    %v276 = vmul.f32 %v271, %v274
    %278 = vrot.lane.b32.xlu0 %v219, 32
    %v279 = vpop.permute.xlu0 %278
    %v281 = vmul.f32 %v258, %v279
    %v282 = vadd.f32 %v276, %v281
    %vm283 = vcmp.gt.s32.totalorder %v140, 1
    %285 = vrot.lane.b32.xlu0 %v282, 96
    %v286 = vpop.permute.xlu0 %285
    %v288 = vsel %vm283, %v286, %v219
    %s289 = scalar_lea.vmem [#allocation2], 16
    %v290 = vld [vmem:[%s289] sm:$0xff]
    %v291 = vpack.c.bf16 %v288, %v288
    %v293 = vsel %vm84, %v291, 0
    %295 = vmatpush.bf16.msra.mxu0 0
    %296 = vmatpush.bf16.msra.mxu0 0
    %297 = vmatpush.bf16.msra.mxu0 0
    %298 = vmatpush.bf16.msra.mxu0 0
    %299 = vmatpush.bf16.msra.mxu0 0
    %300 = vmatpush.bf16.msra.mxu0 0
    %301 = vmatpush.bf16.msra.mxu0 %v151
    %302 = vmatpush.bf16.msra.mxu0 %v150
    %303 = vmatmul.bf16.gmra.mxu0 %v293
    %v304 = vpop.f32.mrf.mxu0
    %v305 = vadd.f32 0.0, %v304
    %v306 = vpop.f32.mrf.mxu0
    %307 = vdwg.mxu0
    %v308 = vadd.f32 %v290, %v305
    %v309 = vxor.u32 %v308, 2147483648
    %v310 = vmul.f32 %v309, 1.442695
    %v311 = vpow.pop %v310
    %v312 = vadd.f32 %v311, 1.0
    %v313 = vrcp.pop %v312
    %v314 = vmul.f32 %v312, %v313
    %v315 = vsub.f32 1.0, %v314
    %v316 = vmul.f32 %v313, %v315
    %v317 = vadd.f32 %v313, %v316
    %vm318 = vweird.f32 %v312
    %vm319 = vweird.f32 %v313
    %vm320 = vmor %vm318, %vm319
    %v321 = vsel %vm320, %v313, %v317
    %v322 = vand.u32 2147483647, %v312
    %vm323 = vcmp.eq.f32.partialorder %v322, 8.507059e+37
    %v324 = vand.u32 %v312, 2147483648
    %v325 = vor.u32 1.1754944e-38, %v324
    %v326 = vsel %vm323, %v325, %v321
    %v327 = vmul.f32 1.0, %v326
    %v328 = vadd.f32 %v305, %v192
    %330 = vrot.lane.b32.xlu0 %v328, 64
    %v331 = vpop.permute.xlu0 %330
    %v333 = vmul.f32 %v327, %v331
    %335 = vrot.lane.b32.xlu0 %v333, 64
    %v336 = vpop.permute.xlu0 %335
    %v338 = vadd.f32 %v290, %v336
    %v339 = vtanh.pop %v338
    %v340 = vsub.f32 1.0, %v327
    %342 = vrot.lane.b32.xlu0 %v339, 96
    %v343 = vpop.permute.xlu0 %342
    %v345 = vmul.f32 %v340, %v343
    %347 = vrot.lane.b32.xlu0 %v288, 32
    %v348 = vpop.permute.xlu0 %347
    %v350 = vmul.f32 %v327, %v348
    %v351 = vadd.f32 %v345, %v350
    %vm352 = vcmp.gt.s32.totalorder %v140, 2
    %354 = vrot.lane.b32.xlu0 %v351, 96
    %v355 = vpop.permute.xlu0 %354
    %v357 = vsel %vm352, %v355, %v288
    %s358 = scalar_lea.vmem [#allocation2], 24
    %v359 = vld [vmem:[%s358] sm:$0xff]
    %v360 = vpack.c.bf16 %v357, %v357
    %v362 = vsel %vm84, %v360, 0
    %364 = vmatpush.bf16.msra.mxu0 0
    %365 = vmatpush.bf16.msra.mxu0 0
    %366 = vmatpush.bf16.msra.mxu0 0
    %367 = vmatpush.bf16.msra.mxu0 0
    %368 = vmatpush.bf16.msra.mxu0 0
    %369 = vmatpush.bf16.msra.mxu0 0
    %370 = vmatpush.bf16.msra.mxu0 %v151
    %371 = vmatpush.bf16.msra.mxu0 %v150
    %372 = vmatmul.bf16.gmra.mxu0 %v362
    %v373 = vpop.f32.mrf.mxu0
    %v374 = vadd.f32 0.0, %v373
    %v375 = vpop.f32.mrf.mxu0
    %376 = vdwg.mxu0
    %v377 = vadd.f32 %v359, %v374
    %v378 = vxor.u32 %v377, 2147483648
    %v379 = vmul.f32 %v378, 1.442695
    %v380 = vpow.pop %v379
    %v381 = vadd.f32 %v380, 1.0
    %v382 = vrcp.pop %v381
    %v383 = vmul.f32 %v381, %v382
    %v384 = vsub.f32 1.0, %v383
    %v385 = vmul.f32 %v382, %v384
    %v386 = vadd.f32 %v382, %v385
    %vm387 = vweird.f32 %v381
    %vm388 = vweird.f32 %v382
    %vm389 = vmor %vm387, %vm388
    %v390 = vsel %vm389, %v382, %v386
    %v391 = vand.u32 2147483647, %v381
    %vm392 = vcmp.eq.f32.partialorder %v391, 8.507059e+37
    %v393 = vand.u32 %v381, 2147483648
    %v394 = vor.u32 1.1754944e-38, %v393
    %v395 = vsel %vm392, %v394, %v390
    %v396 = vmul.f32 1.0, %v395
    %v397 = vadd.f32 %v374, %v192
    %399 = vrot.lane.b32.xlu0 %v397, 64
    %v400 = vpop.permute.xlu0 %399
    %v402 = vmul.f32 %v396, %v400
    %404 = vrot.lane.b32.xlu0 %v402, 64
    %v405 = vpop.permute.xlu0 %404
    %v407 = vadd.f32 %v359, %v405
    %v408 = vtanh.pop %v407
    %v409 = vsub.f32 1.0, %v396
    %411 = vrot.lane.b32.xlu0 %v408, 96
    %v412 = vpop.permute.xlu0 %411
    %v414 = vmul.f32 %v409, %v412
    %416 = vrot.lane.b32.xlu0 %v357, 32
    %v417 = vpop.permute.xlu0 %416
    %v419 = vmul.f32 %v396, %v417
    %v420 = vadd.f32 %v414, %v419
    %vm421 = vcmp.gt.s32.totalorder %v140, 3
    %423 = vrot.lane.b32.xlu0 %v420, 96
    %v424 = vpop.permute.xlu0 %423
    %v426 = vsel %vm421, %v424, %v357
    %s427 = scalar_lea.vmem [#allocation2], 32
    %v428 = vld [vmem:[%s427] sm:$0xff]
    %v429 = vpack.c.bf16 %v426, %v426
    %v431 = vsel %vm84, %v429, 0
    %433 = vmatpush.bf16.msra.mxu0 0
    %434 = vmatpush.bf16.msra.mxu0 0
    %435 = vmatpush.bf16.msra.mxu0 0
    %436 = vmatpush.bf16.msra.mxu0 0
    %437 = vmatpush.bf16.msra.mxu0 0
    %438 = vmatpush.bf16.msra.mxu0 0
    %439 = vmatpush.bf16.msra.mxu0 %v151
    %440 = vmatpush.bf16.msra.mxu0 %v150
    %441 = vmatmul.bf16.gmra.mxu0 %v431
    %v442 = vpop.f32.mrf.mxu0
    %v443 = vadd.f32 0.0, %v442
    %v444 = vpop.f32.mrf.mxu0
    %445 = vdwg.mxu0
    %v446 = vadd.f32 %v428, %v443
    %v447 = vxor.u32 %v446, 2147483648
    %v448 = vmul.f32 %v447, 1.442695
    %v449 = vpow.pop %v448
    %v450 = vadd.f32 %v449, 1.0
    %v451 = vrcp.pop %v450
    %v452 = vmul.f32 %v450, %v451
    %v453 = vsub.f32 1.0, %v452
    %v454 = vmul.f32 %v451, %v453
    %v455 = vadd.f32 %v451, %v454
    %vm456 = vweird.f32 %v450
    %vm457 = vweird.f32 %v451
    %vm458 = vmor %vm456, %vm457
    %v459 = vsel %vm458, %v451, %v455
    %v460 = vand.u32 2147483647, %v450
    %vm461 = vcmp.eq.f32.partialorder %v460, 8.507059e+37
    %v462 = vand.u32 %v450, 2147483648
    %v463 = vor.u32 1.1754944e-38, %v462
    %v464 = vsel %vm461, %v463, %v459
    %v465 = vmul.f32 1.0, %v464
    %v466 = vadd.f32 %v443, %v192
    %468 = vrot.lane.b32.xlu0 %v466, 64
    %v469 = vpop.permute.xlu0 %468
    %v471 = vmul.f32 %v465, %v469
    %473 = vrot.lane.b32.xlu0 %v471, 64
    %v474 = vpop.permute.xlu0 %473
    %v476 = vadd.f32 %v428, %v474
    %v477 = vtanh.pop %v476
    %v478 = vsub.f32 1.0, %v465
    %480 = vrot.lane.b32.xlu0 %v477, 96
    %v481 = vpop.permute.xlu0 %480
    %v483 = vmul.f32 %v478, %v481
    %485 = vrot.lane.b32.xlu0 %v426, 32
    %v486 = vpop.permute.xlu0 %485
    %v488 = vmul.f32 %v465, %v486
    %v489 = vadd.f32 %v483, %v488
    %vm490 = vcmp.gt.s32.totalorder %v140, 4
    %492 = vrot.lane.b32.xlu0 %v489, 96
    %v493 = vpop.permute.xlu0 %492
    %v495 = vsel %vm490, %v493, %v426
    %s496 = scalar_lea.vmem [#allocation2], 40
    %v497 = vld [vmem:[%s496] sm:$0xff]
    %v498 = vpack.c.bf16 %v495, %v495
    %v500 = vsel %vm84, %v498, 0
    %502 = vmatpush.bf16.msra.mxu0 0
    %503 = vmatpush.bf16.msra.mxu0 0
    %504 = vmatpush.bf16.msra.mxu0 0
    %505 = vmatpush.bf16.msra.mxu0 0
    %506 = vmatpush.bf16.msra.mxu0 0
    %507 = vmatpush.bf16.msra.mxu0 0
    %508 = vmatpush.bf16.msra.mxu0 %v151
    %509 = vmatpush.bf16.msra.mxu0 %v150
    %510 = vmatmul.bf16.gmra.mxu0 %v500
    %v511 = vpop.f32.mrf.mxu0
    %v512 = vadd.f32 0.0, %v511
    %v513 = vpop.f32.mrf.mxu0
    %514 = vdwg.mxu0
    %v515 = vadd.f32 %v497, %v512
    %v516 = vxor.u32 %v515, 2147483648
    %v517 = vmul.f32 %v516, 1.442695
    %v518 = vpow.pop %v517
    %v519 = vadd.f32 %v518, 1.0
    %v520 = vrcp.pop %v519
    %v521 = vmul.f32 %v519, %v520
    %v522 = vsub.f32 1.0, %v521
    %v523 = vmul.f32 %v520, %v522
    %v524 = vadd.f32 %v520, %v523
    %vm525 = vweird.f32 %v519
    %vm526 = vweird.f32 %v520
    %vm527 = vmor %vm525, %vm526
    %v528 = vsel %vm527, %v520, %v524
    %v529 = vand.u32 2147483647, %v519
    %vm530 = vcmp.eq.f32.partialorder %v529, 8.507059e+37
    %v531 = vand.u32 %v519, 2147483648
    %v532 = vor.u32 1.1754944e-38, %v531
    %v533 = vsel %vm530, %v532, %v528
    %v534 = vmul.f32 1.0, %v533
    %v535 = vadd.f32 %v512, %v192
    %537 = vrot.lane.b32.xlu0 %v535, 64
    %v538 = vpop.permute.xlu0 %537
    %v540 = vmul.f32 %v534, %v538
    %542 = vrot.lane.b32.xlu0 %v540, 64
    %v543 = vpop.permute.xlu0 %542
    %v545 = vadd.f32 %v497, %v543
    %v546 = vtanh.pop %v545
    %v547 = vsub.f32 1.0, %v534
    %549 = vrot.lane.b32.xlu0 %v546, 96
    %v550 = vpop.permute.xlu0 %549
    %v552 = vmul.f32 %v547, %v550
    %554 = vrot.lane.b32.xlu0 %v495, 32
    %v555 = vpop.permute.xlu0 %554
    %v557 = vmul.f32 %v534, %v555
    %v558 = vadd.f32 %v552, %v557
    %vm559 = vcmp.gt.s32.totalorder %v140, 5
    %561 = vrot.lane.b32.xlu0 %v558, 96
    %v562 = vpop.permute.xlu0 %561
    %v564 = vsel %vm559, %v562, %v495
    %s565 = scalar_lea.vmem [#allocation2], 48
    %v566 = vld [vmem:[%s565] sm:$0xff]
    %v567 = vpack.c.bf16 %v564, %v564
    %v569 = vsel %vm84, %v567, 0
    %571 = vmatpush.bf16.msra.mxu0 0
    %572 = vmatpush.bf16.msra.mxu0 0
    %573 = vmatpush.bf16.msra.mxu0 0
    %574 = vmatpush.bf16.msra.mxu0 0
    %575 = vmatpush.bf16.msra.mxu0 0
    %576 = vmatpush.bf16.msra.mxu0 0
    %577 = vmatpush.bf16.msra.mxu0 %v151
    %578 = vmatpush.bf16.msra.mxu0 %v150
    %579 = vmatmul.bf16.gmra.mxu0 %v569
    %v580 = vpop.f32.mrf.mxu0
    %v581 = vadd.f32 0.0, %v580
    %v582 = vpop.f32.mrf.mxu0
    %583 = vdwg.mxu0
    %v584 = vadd.f32 %v566, %v581
    %v585 = vxor.u32 %v584, 2147483648
    %v586 = vmul.f32 %v585, 1.442695
    %v587 = vpow.pop %v586
    %v588 = vadd.f32 %v587, 1.0
    %v589 = vrcp.pop %v588
    %v590 = vmul.f32 %v588, %v589
    %v591 = vsub.f32 1.0, %v590
    %v592 = vmul.f32 %v589, %v591
    %v593 = vadd.f32 %v589, %v592
    %vm594 = vweird.f32 %v588
    %vm595 = vweird.f32 %v589
    %vm596 = vmor %vm594, %vm595
    %v597 = vsel %vm596, %v589, %v593
    %v598 = vand.u32 2147483647, %v588
    %vm599 = vcmp.eq.f32.partialorder %v598, 8.507059e+37
    %v600 = vand.u32 %v588, 2147483648
    %v601 = vor.u32 1.1754944e-38, %v600
    %v602 = vsel %vm599, %v601, %v597
    %v603 = vmul.f32 1.0, %v602
    %v604 = vadd.f32 %v581, %v192
    %606 = vrot.lane.b32.xlu0 %v604, 64
    %v607 = vpop.permute.xlu0 %606
    %v609 = vmul.f32 %v603, %v607
    %611 = vrot.lane.b32.xlu0 %v609, 64
    %v612 = vpop.permute.xlu0 %611
    %v614 = vadd.f32 %v566, %v612
    %v615 = vtanh.pop %v614
    %v616 = vsub.f32 1.0, %v603
    %618 = vrot.lane.b32.xlu0 %v615, 96
    %v619 = vpop.permute.xlu0 %618
    %v621 = vmul.f32 %v616, %v619
    %623 = vrot.lane.b32.xlu0 %v564, 32
    %v624 = vpop.permute.xlu0 %623
    %v626 = vmul.f32 %v603, %v624
    %v627 = vadd.f32 %v621, %v626
    %vm628 = vcmp.gt.s32.totalorder %v140, 6
    %630 = vrot.lane.b32.xlu0 %v627, 96
    %v631 = vpop.permute.xlu0 %630
    %v633 = vsel %vm628, %v631, %v564
    %s634 = scalar_lea.vmem [#allocation2], 56
    %v635 = vld [vmem:[%s634] sm:$0xff]
    %v636 = vpack.c.bf16 %v633, %v633
    %v638 = vsel %vm84, %v636, 0
    %640 = vmatpush.bf16.msra.mxu0 0
    %641 = vmatpush.bf16.msra.mxu0 0
    %642 = vmatpush.bf16.msra.mxu0 0
    %643 = vmatpush.bf16.msra.mxu0 0
    %644 = vmatpush.bf16.msra.mxu0 0
    %645 = vmatpush.bf16.msra.mxu0 0
    %646 = vmatpush.bf16.msra.mxu0 %v151
    %647 = vmatpush.bf16.msra.mxu0 %v150
    %648 = vmatmul.bf16.gmra.mxu0 %v638
    %v649 = vpop.f32.mrf.mxu0
    %v650 = vadd.f32 0.0, %v649
    %v651 = vpop.f32.mrf.mxu0
    %652 = vdwg.mxu0
    %v653 = vadd.f32 %v635, %v650
    %v654 = vxor.u32 %v653, 2147483648
    %v655 = vmul.f32 %v654, 1.442695
    %v656 = vpow.pop %v655
    %v657 = vadd.f32 %v656, 1.0
    %v658 = vrcp.pop %v657
    %v659 = vmul.f32 %v657, %v658
    %v660 = vsub.f32 1.0, %v659
    %v661 = vmul.f32 %v658, %v660
    %v662 = vadd.f32 %v658, %v661
    %vm663 = vweird.f32 %v657
    %vm664 = vweird.f32 %v658
    %vm665 = vmor %vm663, %vm664
    %v666 = vsel %vm665, %v658, %v662
    %v667 = vand.u32 2147483647, %v657
    %vm668 = vcmp.eq.f32.partialorder %v667, 8.507059e+37
    %v669 = vand.u32 %v657, 2147483648
    %v670 = vor.u32 1.1754944e-38, %v669
    %v671 = vsel %vm668, %v670, %v666
    %v672 = vmul.f32 1.0, %v671
    %v673 = vadd.f32 %v650, %v192
    %675 = vrot.lane.b32.xlu0 %v673, 64
    %v676 = vpop.permute.xlu0 %675
    %v678 = vmul.f32 %v672, %v676
    %680 = vrot.lane.b32.xlu0 %v678, 64
    %v681 = vpop.permute.xlu0 %680
    %v683 = vadd.f32 %v635, %v681
    %v684 = vtanh.pop %v683
    %v685 = vsub.f32 1.0, %v672
    %687 = vrot.lane.b32.xlu0 %v684, 96
    %v688 = vpop.permute.xlu0 %687
    %v690 = vmul.f32 %v685, %v688
    %692 = vrot.lane.b32.xlu0 %v633, 32
    %v693 = vpop.permute.xlu0 %692
    %v695 = vmul.f32 %v672, %v693
    %v696 = vadd.f32 %v690, %v695
    %vm697 = vcmp.gt.s32.totalorder %v140, 7
    %699 = vrot.lane.b32.xlu0 %v696, 96
    %v700 = vpop.permute.xlu0 %699
    %v702 = vsel %vm697, %v700, %v633
    %v703 = vld [vmem:[%s6] sm:$0x1]
    %v704 = vpack.c.bf16 %v702, %v702
    %s705 = sld [smem:[#allocation3]]
    %v706 = vstv %s705
    %v708 = vsel %vm84, %v703, 0
    %v711 = vsel %vm84, %v704, 0
    %713 = vmatpush.bf16.xpose.msra.mxu0 0
    %714 = vmatpush.bf16.xpose.msra.mxu0 0
    %715 = vmatpush.bf16.xpose.msra.mxu0 0
    %716 = vmatpush.bf16.xpose.msra.mxu0 0
    %717 = vmatpush.bf16.xpose.msra.mxu0 0
    %718 = vmatpush.bf16.xpose.msra.mxu0 0
    %719 = vmatpush.bf16.xpose.msra.mxu0 0
    %720 = vmatpush.bf16.xpose.msra.mxu0 %v711
    %721 = vmatmul.bf16.gmra.mxu0 %v708
    %v722 = vpop.f32.mrf.mxu0
    %v723 = vadd.f32 %v706, %v722
    %v724 = vpop.f32.mrf.mxu0
    %725 = vdwg.mxu0
    %v726 = vxor.u32 %v723, 2147483648
    %v727 = vmul.f32 %v726, 1.442695
    %v728 = vpow.pop %v727
    %v729 = vadd.f32 %v728, 1.0
    %v730 = vrcp.pop %v729
    %v731 = vmul.f32 %v729, %v730
    %v732 = vsub.f32 1.0, %v731
    %v733 = vmul.f32 %v730, %v732
    %v734 = vadd.f32 %v730, %v733
    %vm735 = vweird.f32 %v729
    %vm736 = vweird.f32 %v730
    %vm737 = vmor %vm735, %vm736
    %v738 = vsel %vm737, %v730, %v734
    %v739 = vand.u32 2147483647, %v729
    %vm740 = vcmp.eq.f32.partialorder %v739, 8.507059e+37
    %v741 = vand.u32 %v729, 2147483648
    %v742 = vor.u32 1.1754944e-38, %v741
    %v743 = vsel %vm740, %v742, %v738
    %v744 = vmul.f32 1.0, %v743
    %vm745 = vcmask 57344
    %746 = vst.msk [vmem:[#allocation5] sm:$0x1] %vm745, %v744
    // Predicated region
    $region38: #{tpu_custom_call.1} parent=1 // pred_check
      _
    $region39: #{tpu_custom_call.1} parent=1 // pred_check_branch
      %748 = sbr.rel (0) target = $region41
    $region40: #{tpu_custom_call.1} parent=1 // pred_region
      %750 = vsyncadd [#allocation6], 0
      %s752 = sshll.u32 [#allocation5], 4
      %s753 = int_to_ptr.vmem [resolvable:$true] %s752
      %s754 = sshll.u32 %s9, 4
      %s755 = int_to_ptr.hbm [resolvable:$true] %s754
      %757 = dma.vmem_to_hbm [thread:$0]  %s753, 16, %s755, [#allocation6]
    $region41: #{tpu_custom_call.1} parent=1 // pred_fallthru
      _
    // Predicated region
    $region42: #{tpu_custom_call.1} parent=1 // pred_check
      _
    $region43: #{tpu_custom_call.1} parent=1 // pred_check_branch
      %759 = sbr.rel (0) target = $region45
    $region44: #{tpu_custom_call.1} parent=1 // pred_region
      %761 = dma.done [#allocation6], 16
    $region45: #{tpu_custom_call.1} parent=1 // pred_fallthru
      _
    %762 = vsyncpa [#allocation6], 1

</llo_original>
